<compile_context>
chip_gen: v7x
topology: tpu7x:2x2x1
jax: 0.10.0
libtpu: 0.0.40
codegen_flags: <defaults>
</compile_context>

<pallas_src>
import functools

import jax
import jax.numpy as jnp
from jax.experimental import pallas as pl
from jax.experimental.pallas import tpu as pltpu

KH = KW = 3          # kernel_size
STRIDE = 1
PAD = 1


def _neutral_scalar(dtype):
    """Identity element for max under `dtype` (ignored-padding semantics)."""
    dtype = jnp.dtype(dtype)
    if jnp.issubdtype(dtype, jnp.floating):
        return float("-inf")
    if jnp.issubdtype(dtype, jnp.integer):
        return int(jnp.iinfo(dtype).min)
    raise ValueError(f"Unsupported dtype for maxpool2d: {dtype}")


def _vmem_capacity_bytes():
    """Per-TensorCore VMEM capacity; conservative fallback if query fails."""
    try:
        cap = int(pltpu.get_tpu_info().vmem_capacity_bytes)
        if cap > 0:
            return cap
    except Exception:
        pass
    return 64 * 1024 * 1024  # v7x per-TC VMEM (the smallest generation)


def _pick_c_tile(C, HW, itemsize, block_budget_bytes):
    """Channel tile (multiple of 8, or full C) whose (ct, HW) block fits budget."""
    if C <= 8 or C * HW * itemsize <= block_budget_bytes:
        return C
    max_ct = block_budget_bytes // (HW * itemsize)
    max_ct = max(8, (max_ct // 8) * 8)
    max_ct = min(max_ct, C)
    # Prefer a tile that divides C evenly (avoids a ragged last block).
    for cand in range(max_ct, 7, -8):
        if C % cand == 0:
            return cand
    return max_ct  # ragged last block: Pallas masks the out-of-range part


def _maxpool_kernel(col_ref, x_ref, o_ref, *, min_val, W):
    # col_ref: (1, HW) int32 with col_ref[0, p] = p % W (precomputed on host).
    # x_ref / o_ref: (ct, HW) -- one (n, channel-tile) slab, image flattened
    # onto the lane axis. All shifts are lane rolls (XLU); boundaries are
    # masked to the max-identity value, so halo padding is never materialized.
    x = x_ref[...]
    ct, HW = x_ref.shape
    neutral = jnp.asarray(min_val, dtype=x.dtype)

    col = jnp.broadcast_to(col_ref[...], (ct, HW))                    # j = p % W
    pos = jax.lax.broadcasted_iota(jnp.int32, (ct, HW), dimension=1)  # p = i*W + j

    # ---- separable 3-tap max along W (lane roll by +/-1, mask boundary col) ----
    left = jnp.where(col > 0, pltpu.roll(x, 1, axis=1), neutral)             # x[i, j-1]
    right = jnp.where(col < W - 1, pltpu.roll(x, HW - 1, axis=1), neutral)   # x[i, j+1]
    wmax = jnp.maximum(jnp.maximum(left, x), right)

    # ---- separable 3-tap max along H (lane roll by +/-W, mask boundary row) ----
    up = jnp.where(pos >= W, pltpu.roll(wmax, W, axis=1), neutral)               # [i-1, j]
    down = jnp.where(pos < HW - W, pltpu.roll(wmax, HW - W, axis=1), neutral)    # [i+1, j]
    o_ref[...] = jnp.maximum(jnp.maximum(up, wmax), down).astype(o_ref.dtype)


def maxpool2d(x):
    """x: (N, C, H, W). Returns (N, C, H, W) max-pooled with k=3, s=1, p=1."""
    N, C, H, W = x.shape
    HW = H * W
    dtype = x.dtype
    itemsize = jnp.dtype(dtype).itemsize
    min_val = _neutral_scalar(dtype)

    vmem_cap = _vmem_capacity_bytes()
    block_budget = max(vmem_cap // 16, 1 << 20)   # ~4 MiB v7x, ~8 MiB v5e/v6e
    vmem_limit = (vmem_cap * 3) // 4              # 48 MiB v7x, 96 MiB v5e/v6e

    ct = _pick_c_tile(C, HW, itemsize, block_budget)
    block_bytes = ct * HW * itemsize
    # Input + output blocks, each double-buffered by the pipeline.
    # TODO(synk): add H-tiling with a 1-row halo for tiny-C / enormous-image shapes.
    assert 4 * block_bytes <= vmem_limit, (
        f"maxpool2d block ({ct} x {HW} x {itemsize}B) too large for VMEM; "
        "needs H-tiling with a halo")

    x3 = x.reshape(N, C, HW)  # contiguous collapse: free, no extra HBM pass
    col = (jnp.arange(HW, dtype=jnp.int32) % W).reshape(1, HW)
    grid = (N, pl.cdiv(C, ct))

    kernel = functools.partial(_maxpool_kernel, min_val=min_val, W=W)

    out3 = pl.pallas_call(
        kernel,
        out_shape=jax.ShapeDtypeStruct((N, C, HW), dtype),
        grid_spec=pl.GridSpec(
            grid=grid,
            in_specs=[
                pl.BlockSpec((1, HW), lambda n, c: (0, 0)),          # col indices
                pl.BlockSpec((None, ct, HW), lambda n, c: (n, c, 0)),  # input slab
            ],
            out_specs=pl.BlockSpec((None, ct, HW), lambda n, c: (n, c, 0)),
        ),
        compiler_params=pltpu.CompilerParams(
            dimension_semantics=("parallel", "parallel"),
            vmem_limit_bytes=int(vmem_limit),
        ),
        cost_estimate=pl.CostEstimate(
            flops=8 * x.size,                       # 4 maxima + 4 selects / element
            transcendentals=0,
            bytes_accessed=2 * x.size * itemsize,   # one read + one write
        ),
    )(col, x3)

    return out3.reshape(N, C, H, W)


def _reference_maxpool2d(x):
    """Pure-JAX reference (same semantics) for a sanity check."""
    N, C, H, W = x.shape
    min_val = _neutral_scalar(x.dtype)
    xp = jnp.pad(x, ((0, 0), (0, 0), (PAD, PAD), (PAD, PAD)),
                 constant_values=min_val)
    out = jnp.full((N, C, H, W), min_val, dtype=x.dtype)
    for di in range(KH):
        for dj in range(KW):
            out = jnp.maximum(out, xp[:, :, di:di + H, dj:dj + W])
    return out


if __name__ == "__main__":
    key = jax.random.PRNGKey(0)
    # Module: MaxPool2d(in_channels=4, out_channels=4) — pooling only.
    N, C, H, W = 2, 4, 16, 16
    x = jax.random.normal(key, (N, C, H, W), dtype=jnp.float32)

    y = maxpool2d(x)
    y = jax.block_until_ready(y)

    y_ref = _reference_maxpool2d(x)
    assert y.shape == (N, C, H, W)
    assert jnp.allclose(y, y_ref), "Pallas maxpool mismatch vs reference"

    print("KERNEL_OK")
</pallas_src>

<mosaic_0001>
module attributes {stable_mosaic.version = 11 : i64} {
  func.func @_maxpool_kernel(%arg0: i32, %arg1: i32, %arg2: memref<1x256xi32, #tpu.memory_space<vmem>>, %arg3: memref<1x4x256xf32, #tpu.memory_space<vmem>>, %arg4: memref<1x4x256xf32, #tpu.memory_space<vmem>>) attributes {dimension_semantics = [#tpu.dimension_semantics<parallel>, #tpu.dimension_semantics<parallel>], iteration_bounds = array<i64: 2, 1>, scalar_prefetch = 0 : i64, scratch_operands = 0 : i64, tpu.core_type = #tpu.core_type<tc>, window_params = [{pipeline_mode = #tpu.pipeline_mode<synchronous>, transform_indices = @transform_0, window_bounds = array<i64: 1, 256>}, {transform_indices = @transform_1, window_bounds = array<i64: 1, 4, 256>}, {transform_indices = @transform_2, window_bounds = array<i64: 1, 4, 256>}]} {
    %c0 = arith.constant 0 : index
    %c0_0 = arith.constant 0 : index
    %c0_1 = arith.constant 0 : index
    %0 = vector.load %arg3[%c0, %c0_0, %c0_1] : memref<1x4x256xf32, #tpu.memory_space<vmem>>, vector<1x4x256xf32>
    %1 = vector.shape_cast %0 : vector<1x4x256xf32> to vector<4x256xf32>
    %c0_2 = arith.constant 0 : index
    %c0_3 = arith.constant 0 : index
    %2 = vector.load %arg2[%c0_2, %c0_3] : memref<1x256xi32, #tpu.memory_space<vmem>>, vector<1x256xi32>
    %3 = vector.shape_cast %2 : vector<1x256xi32> to vector<1x256xi32>
    %4 = vector.broadcast %3 : vector<1x256xi32> to vector<4x256xi32>
    %5 = tpu.iota {dimensions = array<i32: 1>} : vector<4x256xi32>
    %c0_i32 = arith.constant 0 : i32
    %6 = vector.broadcast %c0_i32 : i32 to vector<4x256xi32>
    %7 = arith.cmpi sgt, %4, %6 : vector<4x256xi32>
    %c1_i32 = arith.constant 1 : i32
    %8 = tpu.dynamic_rotate %1 by %c1_i32 dim 1 : vector<4x256xf32>, i32 -> vector<4x256xf32>
    %cst = arith.constant 0xFF800000 : f32
    %9 = vector.broadcast %cst : f32 to vector<4x256xf32>
    %10 = arith.select %7, %8, %9 : vector<4x256xi1>, vector<4x256xf32>
    %c15_i32 = arith.constant 15 : i32
    %11 = vector.broadcast %c15_i32 : i32 to vector<4x256xi32>
    %12 = arith.cmpi slt, %4, %11 : vector<4x256xi32>
    %c255_i32 = arith.constant 255 : i32
    %13 = tpu.dynamic_rotate %1 by %c255_i32 dim 1 : vector<4x256xf32>, i32 -> vector<4x256xf32>
    %cst_4 = arith.constant 0xFF800000 : f32
    %14 = vector.broadcast %cst_4 : f32 to vector<4x256xf32>
    %15 = arith.select %12, %13, %14 : vector<4x256xi1>, vector<4x256xf32>
    %16 = arith.maximumf %10, %1 : vector<4x256xf32>
    %17 = arith.maximumf %16, %15 : vector<4x256xf32>
    %c16_i32 = arith.constant 16 : i32
    %18 = vector.broadcast %c16_i32 : i32 to vector<4x256xi32>
    %19 = arith.cmpi sge, %5, %18 : vector<4x256xi32>
    %c16_i32_5 = arith.constant 16 : i32
    %20 = tpu.dynamic_rotate %17 by %c16_i32_5 dim 1 : vector<4x256xf32>, i32 -> vector<4x256xf32>
    %cst_6 = arith.constant 0xFF800000 : f32
    %21 = vector.broadcast %cst_6 : f32 to vector<4x256xf32>
    %22 = arith.select %19, %20, %21 : vector<4x256xi1>, vector<4x256xf32>
    %c240_i32 = arith.constant 240 : i32
    %23 = vector.broadcast %c240_i32 : i32 to vector<4x256xi32>
    %24 = arith.cmpi slt, %5, %23 : vector<4x256xi32>
    %c240_i32_7 = arith.constant 240 : i32
    %25 = tpu.dynamic_rotate %17 by %c240_i32_7 dim 1 : vector<4x256xf32>, i32 -> vector<4x256xf32>
    %cst_8 = arith.constant 0xFF800000 : f32
    %26 = vector.broadcast %cst_8 : f32 to vector<4x256xf32>
    %27 = arith.select %24, %25, %26 : vector<4x256xi1>, vector<4x256xf32>
    %28 = arith.maximumf %22, %17 : vector<4x256xf32>
    %29 = arith.maximumf %28, %27 : vector<4x256xf32>
    %c0_9 = arith.constant 0 : index
    %c0_10 = arith.constant 0 : index
    %c0_11 = arith.constant 0 : index
    %30 = vector.load %arg4[%c0_9, %c0_10, %c0_11] : memref<1x4x256xf32, #tpu.memory_space<vmem>>, vector<1x4x256xf32>
    %31 = vector.shape_cast %30 : vector<1x4x256xf32> to vector<4x256xf32>
    %32 = vector.shape_cast %29 : vector<4x256xf32> to vector<1x4x256xf32>
    tpu.vector_store %arg4[%c0_9, %c0_10, %c0_11], %32 {strides = array<i32>} : memref<1x4x256xf32, #tpu.memory_space<vmem>>, vector<1x4x256xf32>,
    return
  }
  func.func @transform_0(%arg0: i32, %arg1: i32) -> (i32, i32) {
    %c0_i32 = arith.constant 0 : i32
    %c0_i32_0 = arith.constant 0 : i32
    %c0_i32_1 = arith.constant 0 : i32
    return %c0_i32, %c0_i32_0 : i32, i32
  }
  func.func @transform_1(%arg0: i32, %arg1: i32) -> (i32, i32, i32) {
    %c0_i32 = arith.constant 0 : i32
    %c0_i32_0 = arith.constant 0 : i32
    return %arg0, %arg1, %c0_i32 : i32, i32, i32
  }
  func.func @transform_2(%arg0: i32, %arg1: i32) -> (i32, i32, i32) {
    %c0_i32 = arith.constant 0 : i32
    %c0_i32_0 = arith.constant 0 : i32
    return %arg0, %arg1, %c0_i32 : i32, i32, i32
  }
}

</mosaic_0001>

<llo_original>
// kernel: tpu_custom_call.1
$region0: #{tpu_custom_call.1}
  #allocation0 [shape = 'u32[]', space=smem, size = 0x4, offset = 0x4, fixed_abs, tag = 'smem constant byte address 0x4 - core index']
  #allocation1 [shape = 'u32[144,128]{1,0:T(1,128)}', space=vmem, size = 0x12000, scoped, tag = 'internal scratch']
  %s0 = inlined_call_operand.hbm [shape: s32[1,256], index: 0, kind: input, shape index: {}]
  %s1 = inlined_call_operand.hbm [shape: f32[2,4,256], index: 1, kind: input, shape index: {}]
  %s2 = inlined_call_operand.hbm [shape: f32[2,4,256], index: 2, kind: output, shape index: {}]
  %s3 = sld [smem:[#allocation0]]
  $region49: #{tpu_custom_call.1} parent=0
    _
  %s5 = ssub.s32 1, %s3
  %s6 = scalar_select 0, %s5, %s3
  $region1: #{tpu_custom_call.1} parent=0
    #allocation2 [shape = 'u8[1024]{0}', space=vmem, size = 0x400, scoped, tag = 'input window, operand 0, single buffered']
    #allocation3 [shape = 's32[2]{0}', space=sflag, size = 0x8, scoped, tag = 'scoped memory for tpu_custom_call.1']
    #allocation4 [shape = 's32[2]{0}', space=sflag, size = 0x8, scoped, tag = 'scoped memory for tpu_custom_call.1']
    #allocation5 [shape = 'u8[8192]{0}', space=vmem, size = 0x2000, scoped, tag = 'input window, operand 1']
    #allocation6 [shape = 's32[2]{0}', space=sflag, size = 0x8, scoped, tag = 'scoped memory for tpu_custom_call.1']
    #allocation7 [shape = 'u8[8192]{0}', space=vmem, size = 0x2000, scoped, tag = 'output window, operand 0']
    %7 = vsyncpa [#allocation3], 0
    %8 = vsyncpa [#allocation6], 0
    %s9 = scalar_lea.sflag [#allocation6], 1
    %10 = vsyncpa %s9, 0
    %11 = vsyncpa [#allocation4], 0
    %s12 = scalar_lea.sflag [#allocation4], 1
    %13 = vsyncpa %s12, 0
    loop: start=0, step=1, limit=4
    $region2: #{tpu_custom_call.1} parent=1 // loop_pre_header
      _
    $region3: #{tpu_custom_call.1} parent=1 // loop_header
      %s15 = sphi 0, %s19
      %p16 = scmp.ge.s32.totalorder %s15, 4
      %s22 = sphi 0, %s34
      %s23 = sphi 0, %s30
      %s24 = sphi 0, %s22
      %s25 = sphi 0, %s23
      %s26 = sphi 0, %s24
      %s27 = sphi 0, %s25
      %s35 = sphi 0, %s35
      %s37 = sphi 0, %s35
      %s38 = sphi 0, %s37
      %s52 = sphi 0, %s38
      %s60 = sphi 0, %s62
      %s63 = sphi 0, %s60
      %s64 = sphi 0, %s63
      %s80 = sphi 0, %s64
      %s88 = sphi 0, %s90
      %s91 = sphi 0, %s88
      %s92 = sphi 0, %s91
      %s108 = sphi 0, %s92
    $region4: #{tpu_custom_call.1} parent=1 // loop_header_branch
      %18 = sbr.rel (%p16) target = $region8
    $region5: #{tpu_custom_call.1} parent=1 // loop_body
      %s20 = ssub.s32 %s15, 1
      %s21 = ssub.s32 %s15, 2
      %s28 = sadd.s32 1, %s23
      %p29 = scmp.ge.s32.totalorder %s28, 1
      %s30 = scalar_select %p29, 0, %s28
      %s31 = sadd.s32 1, %s22
      %s32 = scalar_select %p29, %s31, %s22
      %p33 = scmp.ge.s32.totalorder %s32, 2
      %s34 = scalar_select %p33, 0, %s32
      %s36 = sadd.s32 %s35, 1
      %p39 = scmp.eq.s32.totalorder %s15, 1
      %p40 = scmp.ne.s32.totalorder %s35, %s37
      %p41 = scmp.eq.s32.totalorder %s15, 0
      %p42 = por %p40, %p41
      %p43 = scmp.ne.s32.totalorder %s35, %s37
      %p44 = scmp.eq.s32.totalorder %s20, 1
      %p45 = por %p43, %p44
      %p46 = scmp.ne.s32.totalorder %s37, %s38
      %p47 = scmp.eq.s32.totalorder %s20, 0
      %p48 = por %p46, %p47
      %p49 = scmp.ne.s32.totalorder %s37, %s38
      %p50 = scmp.eq.s32.totalorder %s21, 1
      %p51 = por %p49, %p50
      %p53 = scmp.ne.s32.totalorder %s38, %s52
      %p54 = scmp.eq.s32.totalorder %s21, 0
      %p55 = por %p53, %p54
      %s56 = ssub.s32 %s22, %s34
      %s57 = ssub.s32 %s23, %s30
      %s58 = sor.u32 %s56, %s57
      %p59 = scmp.eq.s32.totalorder %s58, 0
      %s61 = sadd.s32 %s60, 1
      %s62 = scalar_select %p59, %s60, %s61
      %p65 = pneg %p59
      %p66 = scmp.eq.s32.totalorder %s15, 1
      %p67 = por %p65, %p66
      %p68 = scmp.ne.s32.totalorder %s60, %s63
      %p69 = scmp.eq.s32.totalorder %s15, 0
      %p70 = por %p68, %p69
      %p71 = scmp.ne.s32.totalorder %s60, %s63
      %p72 = scmp.eq.s32.totalorder %s20, 1
      %p73 = por %p71, %p72
      %p74 = scmp.ne.s32.totalorder %s63, %s64
      %p75 = scmp.eq.s32.totalorder %s20, 0
      %p76 = por %p74, %p75
      %p77 = scmp.ne.s32.totalorder %s63, %s64
      %p78 = scmp.eq.s32.totalorder %s21, 1
      %p79 = por %p77, %p78
      %p81 = scmp.ne.s32.totalorder %s64, %s80
      %p82 = scmp.eq.s32.totalorder %s21, 0
      %p83 = por %p81, %p82
      %s84 = ssub.s32 %s22, %s34
      %s85 = ssub.s32 %s23, %s30
      %s86 = sor.u32 %s84, %s85
      %p87 = scmp.eq.s32.totalorder %s86, 0
      %s89 = sadd.s32 %s88, 1
      %s90 = scalar_select %p87, %s88, %s89
      %p93 = pneg %p87
      %p94 = scmp.eq.s32.totalorder %s15, 1
      %p95 = por %p93, %p94
      %p96 = scmp.ne.s32.totalorder %s88, %s91
      %p97 = scmp.eq.s32.totalorder %s15, 0
      %p98 = por %p96, %p97
      %p99 = scmp.ne.s32.totalorder %s88, %s91
      %p100 = scmp.eq.s32.totalorder %s20, 1
      %p101 = por %p99, %p100
      %p102 = scmp.ne.s32.totalorder %s91, %s92
      %p103 = scmp.eq.s32.totalorder %s20, 0
      %p104 = por %p102, %p103
      %p105 = scmp.ne.s32.totalorder %s91, %s92
      %p106 = scmp.eq.s32.totalorder %s21, 1
      %p107 = por %p105, %p106
      %p109 = scmp.ne.s32.totalorder %s92, %s108
      %p110 = scmp.eq.s32.totalorder %s21, 0
      %p111 = por %p109, %p110
      %p112 = scmp.le.s32.totalorder 1, %s15
      %p113 = scmp.lt.s32.totalorder %s15, 3
      %p114 = pnand %p112, %p113
      %p115 = pneg %p114
      // Predicated region
      $region9: #{tpu_custom_call.1} parent=5 // pred_check
        _
      $region10: #{tpu_custom_call.1} parent=5 // pred_check_branch
        %117 = sbr.rel (%p114) target = $region12
      $region11: #{tpu_custom_call.1} parent=5 // pred_region
        %s118 = ssub.s32 %s15, 1
        // Predicated region
        $region13: #{tpu_custom_call.1} parent=11 // pred_check
          %p119 = pneg %p48
        $region14: #{tpu_custom_call.1} parent=11 // pred_check_branch
          %121 = sbr.rel (%p119) target = $region16
        $region15: #{tpu_custom_call.1} parent=11 // pred_region
          %s123 = ssub.s32 32, 32
          %124 = vsyncadd [#allocation3], %s123
          %s126 = sshll.u32 [#allocation2], 4
          %s127 = int_to_ptr.vmem [resolvable:$true] %s126
          %129 = dma.hbm_to_vmem [thread:$0]  %s0, 32, %s127, [#allocation3]
        $region16: #{tpu_custom_call.1} parent=11 // pred_fallthru
          _
      $region12: #{tpu_custom_call.1} parent=5 // pred_fallthru
        _
      %p130 = scmp.lt.s32.totalorder %s15, 2
      // Predicated region
      $region17: #{tpu_custom_call.1} parent=5 // pred_check
        %p131 = pneg %p130
      $region18: #{tpu_custom_call.1} parent=5 // pred_check_branch
        %133 = sbr.rel (%p131) target = $region20
      $region19: #{tpu_custom_call.1} parent=5 // pred_region
        // Predicated region
        $region21: #{tpu_custom_call.1} parent=19 // pred_check
          %p134 = pneg %p70
        $region22: #{tpu_custom_call.1} parent=19 // pred_check_branch
          %136 = sbr.rel (%p134) target = $region24
        $region23: #{tpu_custom_call.1} parent=19 // pred_region
          %s137 = sand.u32 %s60, 1
          %s138 = scalar_lea.sflag [#allocation6], %s137
          %s139 = sand.u32 %s60, 1
          %s140 = smul.addr %s139, 8
          %s141 = scalar_lea.vmem [#allocation5], %s140
          %s143 = ssub.s32 128, 128
          %144 = vsyncadd %s138, %s143
          %s145 = smul.addr %s23, 2
          %s146 = smul.addr %s22, 2
          %s147 = sadd.s32 %s145, %s146
          %s148 = smul.addr %s147, 64
          %s149 = scalar_lea.hbm %s1, %s148
          %s151 = sshll.u32 %s141, 4
          %s152 = int_to_ptr.vmem [resolvable:$true] %s151
          %154 = dma.hbm_to_vmem [thread:$0]  %s149, 128, %s152, %s138
        $region24: #{tpu_custom_call.1} parent=19 // pred_fallthru
          _
      $region20: #{tpu_custom_call.1} parent=5 // pred_fallthru
        _
      %p155 = scmp.le.s32.totalorder 1, %s15
      %p156 = scmp.lt.s32.totalorder %s15, 3
      %p157 = pnand %p155, %p156
      %p158 = pneg %p157
      // Predicated region
      $region25: #{tpu_custom_call.1} parent=5 // pred_check
        _
      $region26: #{tpu_custom_call.1} parent=5 // pred_check_branch
        %160 = sbr.rel (%p157) target = $region28
      $region27: #{tpu_custom_call.1} parent=5 // pred_region
        %s161 = ssub.s32 %s15, 1
        // Predicated region
        $region29: #{tpu_custom_call.1} parent=27 // pred_check
          %p162 = pneg %p48
        $region30: #{tpu_custom_call.1} parent=27 // pred_check_branch
          %164 = sbr.rel (%p162) target = $region32
        $region31: #{tpu_custom_call.1} parent=27 // pred_region
          %165 = dma.done [#allocation3], 32
        $region32: #{tpu_custom_call.1} parent=27 // pred_fallthru
          _
        %s166 = sand.u32 %s63, 1
        %s167 = scalar_lea.sflag [#allocation6], %s166
        %s168 = sand.u32 %s63, 1
        %s169 = smul.addr %s168, 8
        %s170 = scalar_lea.vmem [#allocation5], %s169
        // Predicated region
        $region33: #{tpu_custom_call.1} parent=27 // pred_check
          %p171 = pneg %p76
        $region34: #{tpu_custom_call.1} parent=27 // pred_check_branch
          %173 = sbr.rel (%p171) target = $region36
        $region35: #{tpu_custom_call.1} parent=27 // pred_region
          %174 = dma.done %s167, 128
        $region36: #{tpu_custom_call.1} parent=27 // pred_fallthru
          _
        %p175 = pneg %p48
        %p176 = pneg %p45
        %s177 = sand.u32 %s63, 1
        %s178 = scalar_lea.sflag [#allocation6], %s177
        %s179 = sand.u32 %s63, 1
        %s180 = smul.addr %s179, 8
        %s181 = scalar_lea.vmem [#allocation5], %s180
        %p182 = pneg %p76
        %p183 = pneg %p73
        %p184 = pneg %p104
        %p185 = pneg %p101
        %s186 = sand.u32 %s91, 1
        %s187 = scalar_lea.sflag [#allocation4], %s186
        %s188 = sand.u32 %s91, 1
        %s189 = smul.addr %s188, 8
        %s190 = scalar_lea.vmem [#allocation7], %s189
        %v191 = vld [vmem:[%s170] sm:$0xff]
        %v192 = vld [vmem:[#allocation2] sm:$0x3]
        %v193 = vlaneseq
        %v194 = vshrl.u32 %v193, 7
        %v195 = vsub.s32 0, %v194
        %v196 = vrot.slane %v192, %v195
        %v197 = vlaneseq
        %v198 = vshrl.u32 %v197, 7
        %v199 = vsub.s32 1, %v198
        %v200 = vrot.slane %v192, %v199
        %v201 = vlaneseq
        %v202 = vand.u32 %v201, 127
        %v203 = vadd.s32 %v202, 128
        %vm204 = vcmp.gt.s32.totalorder %v196, 0
        %vm205 = vcmp.gt.s32.totalorder %v200, 0
        %v207 = vcombine.high %v191, %v191
        %209 = vrot.lane.b32.xlu0 %v191, 1
        %v210 = vpop.permute.xlu0 %209
        %211 = vrot.lane.b32.xlu0 %v207, 1
        %v212 = vpop.permute.xlu0 %211
        %vm213 = vcmp.lt.s32.totalorder %v202, 1
        %v214 = vsel %vm213, %v210, %v212
        %v215 = vsel %vm213, %v212, %v210
        %v216 = vsel %vm204, %v215, -inf
        %v217 = vsel %vm205, %v214, -inf
        %vm218 = vcmp.lt.s32.totalorder %v196, 15
        %vm219 = vcmp.lt.s32.totalorder %v200, 15
        %220 = vrot.lane.b32.xlu0 %v191, 127
        %v221 = vpop.permute.xlu0 %220
        %222 = vrot.lane.b32.xlu0 %v207, 127
        %v223 = vpop.permute.xlu0 %222
        %vm224 = vcmp.lt.s32.totalorder %v202, 127
        %v225 = vsel %vm224, %v221, %v223
        %v226 = vsel %vm224, %v223, %v221
        %v227 = vsel %vm218, %v225, -inf
        %v228 = vsel %vm219, %v226, -inf
        %v229 = vmax.f32 %v216, %v191
        %v230 = vmax.f32 %v217, %v207
        %v231 = vmax.f32 %v229, %v227
        %v232 = vmax.f32 %v230, %v228
        %vm233 = vcmp.ge.s32.totalorder %v202, 16
        %vm234 = vcmp.ge.s32.totalorder %v203, 16
        %235 = vrot.lane.b32.xlu0 %v231, 16
        %v236 = vpop.permute.xlu0 %235
        %237 = vrot.lane.b32.xlu0 %v232, 16
        %v238 = vpop.permute.xlu0 %237
        %vm239 = vcmp.lt.s32.totalorder %v202, 16
        %v240 = vsel %vm239, %v236, %v238
        %v241 = vsel %vm239, %v238, %v236
        %v242 = vsel %vm233, %v241, -inf
        %v243 = vsel %vm234, %v240, -inf
        %vm244 = vcmp.lt.s32.totalorder %v202, 240
        %vm245 = vcmp.lt.s32.totalorder %v203, 240
        %246 = vrot.lane.b32.xlu0 %v231, 112
        %v247 = vpop.permute.xlu0 %246
        %248 = vrot.lane.b32.xlu0 %v232, 112
        %v249 = vpop.permute.xlu0 %248
        %vm250 = vcmp.lt.s32.totalorder %v202, 112
        %v251 = vsel %vm250, %v247, %v249
        %v252 = vsel %vm250, %v249, %v247
        %v253 = vsel %vm244, %v251, -inf
        %v254 = vsel %vm245, %v252, -inf
        %v255 = vmax.f32 %v242, %v231
        %v256 = vmax.f32 %v243, %v232
        %v257 = vmax.f32 %v255, %v253
        %v258 = vmax.f32 %v256, %v254
        %v261 = vcombine.low %v257, %v258
        %263 = vst [vmem:[%s190] sm:$0xff] %v261
        %s264 = sand.u32 %s91, 1
        %s265 = scalar_lea.sflag [#allocation4], %s264
        %s266 = sand.u32 %s91, 1
        %s267 = smul.addr %s266, 8
        %s268 = scalar_lea.vmem [#allocation7], %s267
        // Predicated region
        $region37: #{tpu_custom_call.1} parent=27 // pred_check
          %p269 = pneg %p101
        $region38: #{tpu_custom_call.1} parent=27 // pred_check_branch
          %271 = sbr.rel (%p269) target = $region40
        $region39: #{tpu_custom_call.1} parent=27 // pred_region
          %s273 = ssub.s32 128, 128
          %274 = vsyncadd %s265, %s273
          %s275 = smul.addr %s25, 2
          %s276 = smul.addr %s24, 2
          %s277 = sadd.s32 %s275, %s276
          %s278 = smul.addr %s277, 64
          %s279 = scalar_lea.hbm %s2, %s278
          %s281 = sshll.u32 %s268, 4
          %s282 = int_to_ptr.vmem [resolvable:$true] %s281
          %284 = dma.vmem_to_hbm [thread:$0]  %s282, 128, %s279, %s265
        $region40: #{tpu_custom_call.1} parent=27 // pred_fallthru
          _
      $region28: #{tpu_custom_call.1} parent=5 // pred_fallthru
        _
      %p285 = scmp.le.s32.totalorder 2, %s15
      // Predicated region
      $region41: #{tpu_custom_call.1} parent=5 // pred_check
        %p286 = pneg %p285
      $region42: #{tpu_custom_call.1} parent=5 // pred_check_branch
        %288 = sbr.rel (%p286) target = $region44
      $region43: #{tpu_custom_call.1} parent=5 // pred_region
        %s289 = ssub.s32 %s15, 2
        // Predicated region
        $region45: #{tpu_custom_call.1} parent=43 // pred_check
          %p290 = pneg %p107
        $region46: #{tpu_custom_call.1} parent=43 // pred_check_branch
          %292 = sbr.rel (%p290) target = $region48
        $region47: #{tpu_custom_call.1} parent=43 // pred_region
          %s293 = sand.u32 %s92, 1
          %s294 = scalar_lea.sflag [#allocation4], %s293
          %s295 = sand.u32 %s92, 1
          %s296 = smul.addr %s295, 8
          %s297 = scalar_lea.vmem [#allocation7], %s296
          %298 = dma.done %s294, 128
        $region48: #{tpu_custom_call.1} parent=43 // pred_fallthru
          _
      $region44: #{tpu_custom_call.1} parent=5 // pred_fallthru
        _
    $region6: #{tpu_custom_call.1} parent=1 // loop_footer
      %s19 = sadd.s32 1, %s15
    $region7: #{tpu_custom_call.1} parent=1 // loop_footer_branch
      %14 = sbr.rel target = $region3
    $region8: #{tpu_custom_call.1} parent=1 // loop_exit
      _
    %299 = vsyncpa [#allocation3], 1
    %s300 = scalar_lea.sflag [#allocation3], 1
    %301 = vsyncpa %s300, 1
    %302 = vsyncpa [#allocation6], 1
    %s303 = scalar_lea.sflag [#allocation6], 1
    %304 = vsyncpa %s303, 1
    %305 = vsyncpa [#allocation4], 1
    %s306 = scalar_lea.sflag [#allocation4], 1
    %307 = vsyncpa %s306, 1

</llo_original>
